<compile_context>
chip_gen: v7x
topology: tpu7x:2x2x1
jax: 0.10.0
libtpu: 0.0.40
codegen_flags: <defaults>
</compile_context>

<pallas_src>
import math

import jax
import jax.numpy as jnp
from jax.experimental import pallas as pl
from jax.experimental.pallas import tpu as pltpu


def critic_kernel(xT_ref, w1_ref, b1_ref, w2_ref, b2_ref, w3_ref, b3_ref, o_ref):
    # Shapes (per grid step):
    #   xT_ref: (in_dim, TB) f32    w1_ref: (H, in_dim) f32   b1_ref: (H, 1) f32
    #   w2_ref: (H, H) f32          b2_ref: (H, 1) f32
    #   w3_ref: (1, H) f32          b3_ref: (1,)  f32 in SMEM
    #   o_ref : (1, 1, TB) f32
    xT = xT_ref[...]                       # (in_dim, TB) f32, batch on lanes
    w1 = w1_ref[...]                       # (H, in_dim)  f32
    in_dim = xT.shape[0]

    # ---- Layer 1: K = in_dim is tiny -> VPU broadcast FMAs in f32 (leave MXU free) ----
    h1 = w1[:, 0:1] * xT[0:1, :]           # (H, TB) rank-1 outer product
    for k in range(1, in_dim):             # static unroll (in_dim == 6)
        h1 = h1 + w1[:, k:k + 1] * xT[k:k + 1, :]
    h1 = jnp.maximum(h1 + b1_ref[...], 0.0)               # (H, TB) f32

    # ---- Layer 2: (H, H) @ (H, TB) on the MXU, bf16 operands / f32 accumulation ----
    h2 = jnp.dot(w2_ref[...].astype(jnp.bfloat16), h1.astype(jnp.bfloat16),
                 preferred_element_type=jnp.float32)       # (H, TB) f32
    h2 = jnp.maximum(h2 + b2_ref[...], 0.0)

    # ---- Layer 3: (1, H) @ (H, TB) -> (1, TB): lane-dense critic values ----
    v = jnp.dot(w3_ref[...].astype(jnp.bfloat16), h2.astype(jnp.bfloat16),
                preferred_element_type=jnp.float32)        # (1, TB) f32
    o_ref[...] = (v + b3_ref[0])[None].astype(o_ref.dtype)  # (1, 1, TB) dense store


def _round_up(n, m):
    return ((n + m - 1) // m) * m


def critic_forward(x, params, *, tb=1024):
    """x: (B, input_dim) f32; params in PyTorch (out, in) layout. Returns (B, 1) f32."""
    w1 = params["w1"]          # (H, in_dim)  == fc1.weight
    b1 = params["b1"]          # (H, 1)
    w2 = params["w2"]          # (H, H)       == fc2.weight
    b2 = params["b2"]          # (H, 1)
    w3 = params["w3"]          # (1, H)       == fc3.weight
    b3 = params["b3"]          # (1,)         -> SMEM scalar

    B, in_dim = x.shape
    H = w1.shape[0]

    # Batch tile: multiple of 128 (lane-dense), big enough to amortize per-grid-step
    # overhead, small enough to (a) not over-pad tiny batches and (b) give >= 2 grid
    # steps when B > 128 so v7x megacore can shard the "parallel" batch axis.
    tb = max(128, 128 * (tb // 128))
    tb = min(tb, _round_up(B, 128))
    if B > 128:
        tb = min(tb, _round_up(pl.cdiv(B, 2), 128))
    g = pl.cdiv(B, tb)
    b_pad = g * tb

    xT = x.T                                   # (in_dim, B): batch goes on the lane axis
    if b_pad != B:
        xT = jnp.pad(xT, ((0, 0), (0, b_pad - B)))

    out = pl.pallas_call(
        critic_kernel,
        out_shape=jax.ShapeDtypeStruct((g, 1, tb), jnp.float32),
        grid=(g,),
        in_specs=[
            pl.BlockSpec((in_dim, tb), lambda i: (0, i)),       # x^T tile moves with grid
            pl.BlockSpec((H, in_dim), lambda i: (0, 0)),        # w1: resident
            pl.BlockSpec((H, 1), lambda i: (0, 0)),             # b1: resident
            pl.BlockSpec((H, H), lambda i: (0, 0)),             # w2: resident
            pl.BlockSpec((H, 1), lambda i: (0, 0)),             # b2: resident
            pl.BlockSpec((1, H), lambda i: (0, 0)),             # w3: resident
            pl.BlockSpec(memory_space=pltpu.MemorySpace.SMEM),  # b3 scalar
        ],
        out_specs=pl.BlockSpec((1, 1, tb), lambda i: (i, 0, 0)),
        compiler_params=pltpu.CompilerParams(
            dimension_semantics=("parallel",),   # megacore sharding on v7x
        ),
    )(xT, w1, b1, w2, b2, w3, b3)

    # TODO(synk): if this critic runs per environment step at small B, stack several
    # timesteps into the batch axis (or fuse the actor head) to amortize launch cost.
    return out.reshape(b_pad)[:B].reshape(B, 1)


def init_critic_params(key, input_dim, hidden=64, output=1):
    """PyTorch nn.Linear-style init (uniform +-1/sqrt(fan_in)), (out, in) weight layout."""
    assert output == 1  # Critic head is scalar; w3 is the (1, hidden) fc3.weight row.
    keys = jax.random.split(key, 6)

    def uniform(k, shape, fan_in):
        bound = 1.0 / math.sqrt(fan_in)
        return jax.random.uniform(k, shape, jnp.float32, -bound, bound)

    w1 = uniform(keys[0], (hidden, input_dim), input_dim)   # fc1.weight
    b1 = uniform(keys[1], (hidden, 1), input_dim)           # fc1.bias (column)
    w2 = uniform(keys[2], (hidden, hidden), hidden)         # fc2.weight
    b2 = uniform(keys[3], (hidden, 1), hidden)              # fc2.bias (column)
    w3 = uniform(keys[4], (1, hidden), hidden)              # fc3.weight
    b3 = uniform(keys[5], (1,), hidden)                     # fc3.bias
    return {"w1": w1, "b1": b1, "w2": w2, "b2": b2, "w3": w3, "b3": b3}


if __name__ == "__main__":
    # SISO_Channel(K=6): state vector length 6.
    INPUT_DIM = 6
    HIDDEN = 64
    BATCH = 200   # not a multiple of 128 -> exercises padding; gives 2 grid steps

    key = jax.random.PRNGKey(0)
    pkey, xkey = jax.random.split(key)

    params = init_critic_params(pkey, INPUT_DIM, HIDDEN, 1)
    x = jax.random.normal(xkey, (BATCH, INPUT_DIM), jnp.float32)

    out = jax.block_until_ready(critic_forward(x, params))

    # Reference with matching precision: layer 1 in f32, layers 2/3 with bf16 operands
    # and f32 accumulation (same casts the kernel performs).
    h1 = jnp.maximum(x @ params["w1"].T + params["b1"].T, 0.0)
    h2 = jnp.maximum(
        jnp.dot(h1.astype(jnp.bfloat16), params["w2"].astype(jnp.bfloat16).T,
                preferred_element_type=jnp.float32) + params["b2"].T, 0.0)
    ref = jnp.dot(h2.astype(jnp.bfloat16), params["w3"].astype(jnp.bfloat16).T,
                  preferred_element_type=jnp.float32) + params["b3"]

    assert out.shape == (BATCH, 1)
    err = float(jnp.max(jnp.abs(out - ref)))
    assert jnp.allclose(out, ref, atol=2e-3, rtol=2e-3), err

    print("KERNEL_OK")
</pallas_src>

<mosaic_0001>
module attributes {stable_mosaic.version = 11 : i64} {
  func.func @critic_kernel(%arg0: i32, %arg1: memref<6x128xf32, #tpu.memory_space<vmem>>, %arg2: memref<64x6xf32, #tpu.memory_space<vmem>>, %arg3: memref<64x1xf32, #tpu.memory_space<vmem>>, %arg4: memref<64x64xf32, #tpu.memory_space<vmem>>, %arg5: memref<64x1xf32, #tpu.memory_space<vmem>>, %arg6: memref<1x64xf32, #tpu.memory_space<vmem>>, %arg7: memref<1xf32, #tpu.memory_space<smem>>, %arg8: memref<1x1x128xf32, #tpu.memory_space<vmem>>) attributes {dimension_semantics = [#tpu.dimension_semantics<parallel>], iteration_bounds = array<i64: 2>, scalar_prefetch = 0 : i64, scratch_operands = 0 : i64, tpu.core_type = #tpu.core_type<tc>, window_params = [{transform_indices = @transform_0, window_bounds = array<i64: 6, 128>}, {pipeline_mode = #tpu.pipeline_mode<synchronous>, transform_indices = @transform_1, window_bounds = array<i64: 64, 6>}, {pipeline_mode = #tpu.pipeline_mode<synchronous>, transform_indices = @transform_2, window_bounds = array<i64: 64, 1>}, {pipeline_mode = #tpu.pipeline_mode<synchronous>, transform_indices = @transform_3, window_bounds = array<i64: 64, 64>}, {pipeline_mode = #tpu.pipeline_mode<synchronous>, transform_indices = @transform_4, window_bounds = array<i64: 64, 1>}, {pipeline_mode = #tpu.pipeline_mode<synchronous>, transform_indices = @transform_5, window_bounds = array<i64: 1, 64>}, {transform_indices = @transform_6, window_bounds = array<i64: 1>}, {transform_indices = @transform_7, window_bounds = array<i64: 1, 1, 128>}]} {
    %c0 = arith.constant 0 : index
    %c0_0 = arith.constant 0 : index
    %0 = vector.load %arg1[%c0, %c0_0] : memref<6x128xf32, #tpu.memory_space<vmem>>, vector<6x128xf32>
    %c0_1 = arith.constant 0 : index
    %c0_2 = arith.constant 0 : index
    %1 = vector.load %arg2[%c0_1, %c0_2] : memref<64x6xf32, #tpu.memory_space<vmem>>, vector<64x6xf32>
    %2 = vector.extract_strided_slice %1 {offsets = [0, 0], sizes = [64, 1], strides = [1, 1]} : vector<64x6xf32> to vector<64x1xf32>
    %3 = vector.extract_strided_slice %0 {offsets = [0, 0], sizes = [1, 128], strides = [1, 1]} : vector<6x128xf32> to vector<1x128xf32>
    %4 = vector.broadcast %2 : vector<64x1xf32> to vector<64x128xf32>
    %5 = vector.broadcast %3 : vector<1x128xf32> to vector<64x128xf32>
    %6 = arith.mulf %4, %5 : vector<64x128xf32>
    %7 = vector.extract_strided_slice %1 {offsets = [0, 1], sizes = [64, 1], strides = [1, 1]} : vector<64x6xf32> to vector<64x1xf32>
    %8 = vector.extract_strided_slice %0 {offsets = [1, 0], sizes = [1, 128], strides = [1, 1]} : vector<6x128xf32> to vector<1x128xf32>
    %9 = vector.broadcast %7 : vector<64x1xf32> to vector<64x128xf32>
    %10 = vector.broadcast %8 : vector<1x128xf32> to vector<64x128xf32>
    %11 = arith.mulf %9, %10 : vector<64x128xf32>
    %12 = arith.addf %6, %11 : vector<64x128xf32>
    %13 = vector.extract_strided_slice %1 {offsets = [0, 2], sizes = [64, 1], strides = [1, 1]} : vector<64x6xf32> to vector<64x1xf32>
    %14 = vector.extract_strided_slice %0 {offsets = [2, 0], sizes = [1, 128], strides = [1, 1]} : vector<6x128xf32> to vector<1x128xf32>
    %15 = vector.broadcast %13 : vector<64x1xf32> to vector<64x128xf32>
    %16 = vector.broadcast %14 : vector<1x128xf32> to vector<64x128xf32>
    %17 = arith.mulf %15, %16 : vector<64x128xf32>
    %18 = arith.addf %12, %17 : vector<64x128xf32>
    %19 = vector.extract_strided_slice %1 {offsets = [0, 3], sizes = [64, 1], strides = [1, 1]} : vector<64x6xf32> to vector<64x1xf32>
    %20 = vector.extract_strided_slice %0 {offsets = [3, 0], sizes = [1, 128], strides = [1, 1]} : vector<6x128xf32> to vector<1x128xf32>
    %21 = vector.broadcast %19 : vector<64x1xf32> to vector<64x128xf32>
    %22 = vector.broadcast %20 : vector<1x128xf32> to vector<64x128xf32>
    %23 = arith.mulf %21, %22 : vector<64x128xf32>
    %24 = arith.addf %18, %23 : vector<64x128xf32>
    %25 = vector.extract_strided_slice %1 {offsets = [0, 4], sizes = [64, 1], strides = [1, 1]} : vector<64x6xf32> to vector<64x1xf32>
    %26 = vector.extract_strided_slice %0 {offsets = [4, 0], sizes = [1, 128], strides = [1, 1]} : vector<6x128xf32> to vector<1x128xf32>
    %27 = vector.broadcast %25 : vector<64x1xf32> to vector<64x128xf32>
    %28 = vector.broadcast %26 : vector<1x128xf32> to vector<64x128xf32>
    %29 = arith.mulf %27, %28 : vector<64x128xf32>
    %30 = arith.addf %24, %29 : vector<64x128xf32>
    %31 = vector.extract_strided_slice %1 {offsets = [0, 5], sizes = [64, 1], strides = [1, 1]} : vector<64x6xf32> to vector<64x1xf32>
    %32 = vector.extract_strided_slice %0 {offsets = [5, 0], sizes = [1, 128], strides = [1, 1]} : vector<6x128xf32> to vector<1x128xf32>
    %33 = vector.broadcast %31 : vector<64x1xf32> to vector<64x128xf32>
    %34 = vector.broadcast %32 : vector<1x128xf32> to vector<64x128xf32>
    %35 = arith.mulf %33, %34 : vector<64x128xf32>
    %36 = arith.addf %30, %35 : vector<64x128xf32>
    %c0_3 = arith.constant 0 : index
    %c0_4 = arith.constant 0 : index
    %37 = vector.load %arg3[%c0_3, %c0_4] : memref<64x1xf32, #tpu.memory_space<vmem>>, vector<64x1xf32>
    %38 = vector.broadcast %37 : vector<64x1xf32> to vector<64x128xf32>
    %39 = arith.addf %36, %38 : vector<64x128xf32>
    %cst = arith.constant 0.000000e+00 : f32
    %40 = vector.broadcast %cst : f32 to vector<64x128xf32>
    %41 = arith.maximumf %39, %40 : vector<64x128xf32>
    %c0_5 = arith.constant 0 : index
    %c0_6 = arith.constant 0 : index
    %42 = vector.load %arg4[%c0_5, %c0_6] : memref<64x64xf32, #tpu.memory_space<vmem>>, vector<64x64xf32>
    %43 = arith.truncf %42 : vector<64x64xf32> to vector<64x64xbf16>
    %44 = arith.truncf %41 : vector<64x128xf32> to vector<64x128xbf16>
    %cst_7 = arith.constant dense<0.000000e+00> : vector<64x128xf32>
    %45 = tpu.matmul %43, %44, %cst_7 {dimension_numbers = #tpu.dot_dimension_numbers<[1], [0], [0], [1], [0, 0, 1, 1], [], []>} : vector<64x64xbf16>, vector<64x128xbf16>, vector<64x128xf32> -> vector<64x128xf32>
    %c0_8 = arith.constant 0 : index
    %c0_9 = arith.constant 0 : index
    %46 = vector.load %arg5[%c0_8, %c0_9] : memref<64x1xf32, #tpu.memory_space<vmem>>, vector<64x1xf32>
    %47 = vector.broadcast %46 : vector<64x1xf32> to vector<64x128xf32>
    %48 = arith.addf %45, %47 : vector<64x128xf32>
    %cst_10 = arith.constant 0.000000e+00 : f32
    %49 = vector.broadcast %cst_10 : f32 to vector<64x128xf32>
    %50 = arith.maximumf %48, %49 : vector<64x128xf32>
    %c0_11 = arith.constant 0 : index
    %c0_12 = arith.constant 0 : index
    %51 = vector.load %arg6[%c0_11, %c0_12] : memref<1x64xf32, #tpu.memory_space<vmem>>, vector<1x64xf32>
    %52 = arith.truncf %51 : vector<1x64xf32> to vector<1x64xbf16>
    %53 = arith.truncf %50 : vector<64x128xf32> to vector<64x128xbf16>
    %cst_13 = arith.constant dense<0.000000e+00> : vector<1x128xf32>
    %54 = tpu.matmul %52, %53, %cst_13 {dimension_numbers = #tpu.dot_dimension_numbers<[1], [0], [0], [1], [0, 0, 1, 1], [], []>} : vector<1x64xbf16>, vector<64x128xbf16>, vector<1x128xf32> -> vector<1x128xf32>
    %c0_14 = arith.constant 0 : index
    %55 = memref.load %arg7[%c0_14] : memref<1xf32, #tpu.memory_space<smem>>
    %56 = vector.broadcast %55 : f32 to vector<1x128xf32>
    %57 = arith.addf %54, %56 : vector<1x128xf32>
    %58 = vector.shape_cast %57 : vector<1x128xf32> to vector<1x1x128xf32>
    %c0_15 = arith.constant 0 : index
    %c0_16 = arith.constant 0 : index
    %c0_17 = arith.constant 0 : index
    %59 = vector.load %arg8[%c0_15, %c0_16, %c0_17] : memref<1x1x128xf32, #tpu.memory_space<vmem>>, vector<1x1x128xf32>
    tpu.vector_store %arg8[%c0_15, %c0_16, %c0_17], %58 {strides = array<i32>} : memref<1x1x128xf32, #tpu.memory_space<vmem>>, vector<1x1x128xf32>,
    return
  }
  func.func @transform_0(%arg0: i32) -> (i32, i32) {
    %c0_i32 = arith.constant 0 : i32
    %c0_i32_0 = arith.constant 0 : i32
    return %c0_i32, %arg0 : i32, i32
  }
  func.func @transform_1(%arg0: i32) -> (i32, i32) {
    %c0_i32 = arith.constant 0 : i32
    %c0_i32_0 = arith.constant 0 : i32
    %c0_i32_1 = arith.constant 0 : i32
    return %c0_i32, %c0_i32_0 : i32, i32
  }
  func.func @transform_2(%arg0: i32) -> (i32, i32) {
    %c0_i32 = arith.constant 0 : i32
    %c0_i32_0 = arith.constant 0 : i32
    %c0_i32_1 = arith.constant 0 : i32
    return %c0_i32, %c0_i32_0 : i32, i32
  }
  func.func @transform_3(%arg0: i32) -> (i32, i32) {
    %c0_i32 = arith.constant 0 : i32
    %c0_i32_0 = arith.constant 0 : i32
    %c0_i32_1 = arith.constant 0 : i32
    return %c0_i32, %c0_i32_0 : i32, i32
  }
  func.func @transform_4(%arg0: i32) -> (i32, i32) {
    %c0_i32 = arith.constant 0 : i32
    %c0_i32_0 = arith.constant 0 : i32
    %c0_i32_1 = arith.constant 0 : i32
    return %c0_i32, %c0_i32_0 : i32, i32
  }
  func.func @transform_5(%arg0: i32) -> (i32, i32) {
    %c0_i32 = arith.constant 0 : i32
    %c0_i32_0 = arith.constant 0 : i32
    %c0_i32_1 = arith.constant 0 : i32
    return %c0_i32, %c0_i32_0 : i32, i32
  }
  func.func @transform_6(%arg0: i32) -> i32 {
    %c0_i32 = arith.constant 0 : i32
    %c0_i32_0 = arith.constant 0 : i32
    return %c0_i32 : i32
  }
  func.func @transform_7(%arg0: i32) -> (i32, i32, i32) {
    %c0_i32 = arith.constant 0 : i32
    %c0_i32_0 = arith.constant 0 : i32
    %c0_i32_1 = arith.constant 0 : i32
    return %arg0, %c0_i32, %c0_i32_0 : i32, i32, i32
  }
}

</mosaic_0001>

<llo_original>
// kernel: tpu_custom_call.1
$region0: #{tpu_custom_call.1}
  #allocation0 [shape = 'u32[]', space=smem, size = 0x4, offset = 0x4, fixed_abs, tag = 'smem constant byte address 0x4 - core index']
  #allocation1 [shape = 'u32[144,128]{1,0:T(1,128)}', space=vmem, size = 0x12000, scoped, tag = 'internal scratch']
  #allocation2 [shape = 'f32[1]{0:T(128)S(6)}', space=smem, size = 0x200, scoped, tag = 'scoped memory for tpu_custom_call.1']
  %s0 = inlined_call_operand.vmem [shape: f32[6,256], index: 0, kind: input, shape index: {}]
  %s1 = inlined_call_operand.vmem [shape: f32[64,6], index: 1, kind: input, shape index: {}]
  %s2 = inlined_call_operand.vmem [shape: f32[64,1], index: 2, kind: input, shape index: {}]
  %s3 = inlined_call_operand.vmem [shape: f32[64,64], index: 3, kind: input, shape index: {}]
  %s4 = inlined_call_operand.vmem [shape: f32[64,1], index: 4, kind: input, shape index: {}]
  %s5 = inlined_call_operand.vmem [shape: f32[1,64], index: 5, kind: input, shape index: {}]
  %s6 = inlined_call_operand.<no memory space> [shape: f32[1], index: 6, kind: input, shape index: {}]
  %s7 = inlined_call_operand.hbm [shape: f32[2,1,128], index: 7, kind: output, shape index: {}]
  %s8 = sld [smem:[#allocation0]]
  $region61: #{tpu_custom_call.1} parent=0
    _
  %s10 = ssub.s32 1, %s8
  %s11 = scalar_select 0, %s10, %s8
  %12 = sst [smem:[#allocation2]] %s6
  $region1: #{tpu_custom_call.1} parent=0
    #allocation3 [shape = 'u8[1024]{0}', space=vmem, size = 0x400, scoped, tag = 'output window, operand 0']
    #allocation4 [shape = 's32[2]{0}', space=sflag, size = 0x8, scoped, tag = 'scoped memory for tpu_custom_call.1']
    %13 = vsyncpa [#allocation4], 0
    %s14 = scalar_lea.sflag [#allocation4], 1
    %15 = vsyncpa %s14, 0
    loop: start=0, step=1, limit=4
    $region2: #{tpu_custom_call.1} parent=1 // loop_pre_header
      _
    $region3: #{tpu_custom_call.1} parent=1 // loop_header
      %s17 = sphi 0, %s21
      %p18 = scmp.ge.s32.totalorder %s17, 4
      %s27 = sphi 0, %s29
      %s30 = sphi 0, %s27
      %s31 = sphi 0, %s30
      %s47 = sphi 0, %s31
      %s51 = sphi 0, %s51
      %s53 = sphi 0, %s51
      %s54 = sphi 0, %s53
      %s68 = sphi 0, %s54
      %s72 = sphi 0, %s72
      %s74 = sphi 0, %s72
      %s75 = sphi 0, %s74
      %s89 = sphi 0, %s75
      %s93 = sphi 0, %s93
      %s95 = sphi 0, %s93
      %s96 = sphi 0, %s95
      %s110 = sphi 0, %s96
      %s114 = sphi 0, %s114
      %s116 = sphi 0, %s114
      %s117 = sphi 0, %s116
      %s131 = sphi 0, %s117
      %s135 = sphi 0, %s135
      %s137 = sphi 0, %s135
      %s138 = sphi 0, %s137
      %s152 = sphi 0, %s138
      %s156 = sphi 0, %s156
      %s158 = sphi 0, %s156
      %s159 = sphi 0, %s158
      %s173 = sphi 0, %s159
      %s179 = sphi 0, %s181
      %s182 = sphi 0, %s179
      %s183 = sphi 0, %s182
      %s199 = sphi 0, %s183
    $region4: #{tpu_custom_call.1} parent=1 // loop_header_branch
      %20 = sbr.rel (%p18) target = $region8
    $region5: #{tpu_custom_call.1} parent=1 // loop_body
      %s22 = ssub.s32 %s17, 1
      %s23 = ssub.s32 %s17, 2
      %s24 = sadd.s32 %s17, 1
      %s25 = ssub.s32 %s17, %s24
      %p26 = scmp.eq.s32.totalorder %s25, 0
      %s28 = sadd.s32 %s27, 1
      %s29 = scalar_select %p26, %s27, %s28
      %p32 = pneg %p26
      %p33 = scmp.eq.s32.totalorder %s17, 1
      %p34 = por %p32, %p33
      %p35 = scmp.ne.s32.totalorder %s27, %s30
      %p36 = scmp.eq.s32.totalorder %s17, 0
      %p37 = por %p35, %p36
      %p38 = scmp.ne.s32.totalorder %s27, %s30
      %p39 = scmp.eq.s32.totalorder %s22, 1
      %p40 = por %p38, %p39
      %p41 = scmp.ne.s32.totalorder %s30, %s31
      %p42 = scmp.eq.s32.totalorder %s22, 0
      %p43 = por %p41, %p42
      %p44 = scmp.ne.s32.totalorder %s30, %s31
      %p45 = scmp.eq.s32.totalorder %s23, 1
      %p46 = por %p44, %p45
      %p48 = scmp.ne.s32.totalorder %s31, %s47
      %p49 = scmp.eq.s32.totalorder %s23, 0
      %p50 = por %p48, %p49
      %s52 = sadd.s32 %s51, 1
      %p55 = scmp.eq.s32.totalorder %s17, 1
      %p56 = scmp.ne.s32.totalorder %s51, %s53
      %p57 = scmp.eq.s32.totalorder %s17, 0
      %p58 = por %p56, %p57
      %p59 = scmp.ne.s32.totalorder %s51, %s53
      %p60 = scmp.eq.s32.totalorder %s22, 1
      %p61 = por %p59, %p60
      %p62 = scmp.ne.s32.totalorder %s53, %s54
      %p63 = scmp.eq.s32.totalorder %s22, 0
      %p64 = por %p62, %p63
      %p65 = scmp.ne.s32.totalorder %s53, %s54
      %p66 = scmp.eq.s32.totalorder %s23, 1
      %p67 = por %p65, %p66
      %p69 = scmp.ne.s32.totalorder %s54, %s68
      %p70 = scmp.eq.s32.totalorder %s23, 0
      %p71 = por %p69, %p70
      %s73 = sadd.s32 %s72, 1
      %p76 = scmp.eq.s32.totalorder %s17, 1
      %p77 = scmp.ne.s32.totalorder %s72, %s74
      %p78 = scmp.eq.s32.totalorder %s17, 0
      %p79 = por %p77, %p78
      %p80 = scmp.ne.s32.totalorder %s72, %s74
      %p81 = scmp.eq.s32.totalorder %s22, 1
      %p82 = por %p80, %p81
      %p83 = scmp.ne.s32.totalorder %s74, %s75
      %p84 = scmp.eq.s32.totalorder %s22, 0
      %p85 = por %p83, %p84
      %p86 = scmp.ne.s32.totalorder %s74, %s75
      %p87 = scmp.eq.s32.totalorder %s23, 1
      %p88 = por %p86, %p87
      %p90 = scmp.ne.s32.totalorder %s75, %s89
      %p91 = scmp.eq.s32.totalorder %s23, 0
      %p92 = por %p90, %p91
      %s94 = sadd.s32 %s93, 1
      %p97 = scmp.eq.s32.totalorder %s17, 1
      %p98 = scmp.ne.s32.totalorder %s93, %s95
      %p99 = scmp.eq.s32.totalorder %s17, 0
      %p100 = por %p98, %p99
      %p101 = scmp.ne.s32.totalorder %s93, %s95
      %p102 = scmp.eq.s32.totalorder %s22, 1
      %p103 = por %p101, %p102
      %p104 = scmp.ne.s32.totalorder %s95, %s96
      %p105 = scmp.eq.s32.totalorder %s22, 0
      %p106 = por %p104, %p105
      %p107 = scmp.ne.s32.totalorder %s95, %s96
      %p108 = scmp.eq.s32.totalorder %s23, 1
      %p109 = por %p107, %p108
      %p111 = scmp.ne.s32.totalorder %s96, %s110
      %p112 = scmp.eq.s32.totalorder %s23, 0
      %p113 = por %p111, %p112
      %s115 = sadd.s32 %s114, 1
      %p118 = scmp.eq.s32.totalorder %s17, 1
      %p119 = scmp.ne.s32.totalorder %s114, %s116
      %p120 = scmp.eq.s32.totalorder %s17, 0
      %p121 = por %p119, %p120
      %p122 = scmp.ne.s32.totalorder %s114, %s116
      %p123 = scmp.eq.s32.totalorder %s22, 1
      %p124 = por %p122, %p123
      %p125 = scmp.ne.s32.totalorder %s116, %s117
      %p126 = scmp.eq.s32.totalorder %s22, 0
      %p127 = por %p125, %p126
      %p128 = scmp.ne.s32.totalorder %s116, %s117
      %p129 = scmp.eq.s32.totalorder %s23, 1
      %p130 = por %p128, %p129
      %p132 = scmp.ne.s32.totalorder %s117, %s131
      %p133 = scmp.eq.s32.totalorder %s23, 0
      %p134 = por %p132, %p133
      %s136 = sadd.s32 %s135, 1
      %p139 = scmp.eq.s32.totalorder %s17, 1
      %p140 = scmp.ne.s32.totalorder %s135, %s137
      %p141 = scmp.eq.s32.totalorder %s17, 0
      %p142 = por %p140, %p141
      %p143 = scmp.ne.s32.totalorder %s135, %s137
      %p144 = scmp.eq.s32.totalorder %s22, 1
      %p145 = por %p143, %p144
      %p146 = scmp.ne.s32.totalorder %s137, %s138
      %p147 = scmp.eq.s32.totalorder %s22, 0
      %p148 = por %p146, %p147
      %p149 = scmp.ne.s32.totalorder %s137, %s138
      %p150 = scmp.eq.s32.totalorder %s23, 1
      %p151 = por %p149, %p150
      %p153 = scmp.ne.s32.totalorder %s138, %s152
      %p154 = scmp.eq.s32.totalorder %s23, 0
      %p155 = por %p153, %p154
      %s157 = sadd.s32 %s156, 1
      %p160 = scmp.eq.s32.totalorder %s17, 1
      %p161 = scmp.ne.s32.totalorder %s156, %s158
      %p162 = scmp.eq.s32.totalorder %s17, 0
      %p163 = por %p161, %p162
      %p164 = scmp.ne.s32.totalorder %s156, %s158
      %p165 = scmp.eq.s32.totalorder %s22, 1
      %p166 = por %p164, %p165
      %p167 = scmp.ne.s32.totalorder %s158, %s159
      %p168 = scmp.eq.s32.totalorder %s22, 0
      %p169 = por %p167, %p168
      %p170 = scmp.ne.s32.totalorder %s158, %s159
      %p171 = scmp.eq.s32.totalorder %s23, 1
      %p172 = por %p170, %p171
      %p174 = scmp.ne.s32.totalorder %s159, %s173
      %p175 = scmp.eq.s32.totalorder %s23, 0
      %p176 = por %p174, %p175
      %s177 = ssub.s32 %s17, %s24
      %p178 = scmp.eq.s32.totalorder %s177, 0
      %s180 = sadd.s32 %s179, 1
      %s181 = scalar_select %p178, %s179, %s180
      %p184 = pneg %p178
      %p185 = scmp.eq.s32.totalorder %s17, 1
      %p186 = por %p184, %p185
      %p187 = scmp.ne.s32.totalorder %s179, %s182
      %p188 = scmp.eq.s32.totalorder %s17, 0
      %p189 = por %p187, %p188
      %p190 = scmp.ne.s32.totalorder %s179, %s182
      %p191 = scmp.eq.s32.totalorder %s22, 1
      %p192 = por %p190, %p191
      %p193 = scmp.ne.s32.totalorder %s182, %s183
      %p194 = scmp.eq.s32.totalorder %s22, 0
      %p195 = por %p193, %p194
      %p196 = scmp.ne.s32.totalorder %s182, %s183
      %p197 = scmp.eq.s32.totalorder %s23, 1
      %p198 = por %p196, %p197
      %p200 = scmp.ne.s32.totalorder %s183, %s199
      %p201 = scmp.eq.s32.totalorder %s23, 0
      %p202 = por %p200, %p201
      %p203 = scmp.le.s32.totalorder 1, %s17
      %p204 = scmp.lt.s32.totalorder %s17, 3
      %p205 = pnand %p203, %p204
      %p206 = pneg %p205
      // Predicated region
      $region9: #{tpu_custom_call.1} parent=5 // pred_check
        _
      $region10: #{tpu_custom_call.1} parent=5 // pred_check_branch
        %208 = sbr.rel (%p205) target = $region12
      $region11: #{tpu_custom_call.1} parent=5 // pred_region
        %s209 = ssub.s32 %s17, 1
        // Predicated region
        $region13: #{tpu_custom_call.1} parent=11 // pred_check
          %p210 = pneg %p64
        $region14: #{tpu_custom_call.1} parent=11 // pred_check_branch
          %212 = sbr.rel (%p210) target = $region16
        $region15: #{tpu_custom_call.1} parent=11 // pred_region
          _
        $region16: #{tpu_custom_call.1} parent=11 // pred_fallthru
          _
        // Predicated region
        $region17: #{tpu_custom_call.1} parent=11 // pred_check
          %p213 = pneg %p85
        $region18: #{tpu_custom_call.1} parent=11 // pred_check_branch
          %215 = sbr.rel (%p213) target = $region20
        $region19: #{tpu_custom_call.1} parent=11 // pred_region
          _
        $region20: #{tpu_custom_call.1} parent=11 // pred_fallthru
          _
        // Predicated region
        $region21: #{tpu_custom_call.1} parent=11 // pred_check
          %p216 = pneg %p106
        $region22: #{tpu_custom_call.1} parent=11 // pred_check_branch
          %218 = sbr.rel (%p216) target = $region24
        $region23: #{tpu_custom_call.1} parent=11 // pred_region
          _
        $region24: #{tpu_custom_call.1} parent=11 // pred_fallthru
          _
        // Predicated region
        $region25: #{tpu_custom_call.1} parent=11 // pred_check
          %p219 = pneg %p127
        $region26: #{tpu_custom_call.1} parent=11 // pred_check_branch
          %221 = sbr.rel (%p219) target = $region28
        $region27: #{tpu_custom_call.1} parent=11 // pred_region
          _
        $region28: #{tpu_custom_call.1} parent=11 // pred_fallthru
          _
        // Predicated region
        $region29: #{tpu_custom_call.1} parent=11 // pred_check
          %p222 = pneg %p148
        $region30: #{tpu_custom_call.1} parent=11 // pred_check_branch
          %224 = sbr.rel (%p222) target = $region32
        $region31: #{tpu_custom_call.1} parent=11 // pred_region
          _
        $region32: #{tpu_custom_call.1} parent=11 // pred_fallthru
          _
        // Predicated region
        $region33: #{tpu_custom_call.1} parent=11 // pred_check
          %p225 = pneg %p169
        $region34: #{tpu_custom_call.1} parent=11 // pred_check_branch
          %227 = sbr.rel (%p225) target = $region36
        $region35: #{tpu_custom_call.1} parent=11 // pred_region
          _
        $region36: #{tpu_custom_call.1} parent=11 // pred_fallthru
          _
      $region12: #{tpu_custom_call.1} parent=5 // pred_fallthru
        _
      %p228 = scmp.lt.s32.totalorder %s17, 2
      // Predicated region
      $region37: #{tpu_custom_call.1} parent=5 // pred_check
        %p229 = pneg %p228
      $region38: #{tpu_custom_call.1} parent=5 // pred_check_branch
        %231 = sbr.rel (%p229) target = $region40
      $region39: #{tpu_custom_call.1} parent=5 // pred_region
        // Predicated region
        $region41: #{tpu_custom_call.1} parent=39 // pred_check
          %p232 = pneg %p37
        $region42: #{tpu_custom_call.1} parent=39 // pred_check_branch
          %234 = sbr.rel (%p232) target = $region44
        $region43: #{tpu_custom_call.1} parent=39 // pred_region
          %p235 = scmp.lt.s32.totalorder %s17, 1
          %s236 = scalar_select %p235, %s17, 1
          %s237 = smul.addr %s236, 8
          %s238 = scalar_lea.vmem %s0, %s237
        $region44: #{tpu_custom_call.1} parent=39 // pred_fallthru
          _
      $region40: #{tpu_custom_call.1} parent=5 // pred_fallthru
        _
      %p239 = scmp.le.s32.totalorder 1, %s17
      %p240 = scmp.lt.s32.totalorder %s17, 3
      %p241 = pnand %p239, %p240
      %p242 = pneg %p241
      // Predicated region
      $region45: #{tpu_custom_call.1} parent=5 // pred_check
        _
      $region46: #{tpu_custom_call.1} parent=5 // pred_check_branch
        %244 = sbr.rel (%p241) target = $region48
      $region47: #{tpu_custom_call.1} parent=5 // pred_region
        %s245 = ssub.s32 %s17, 1
        %p246 = scmp.lt.s32.totalorder %s22, 1
        %s247 = scalar_select %p246, %s22, 1
        %s248 = smul.addr %s247, 8
        %s249 = scalar_lea.vmem %s0, %s248
        %p250 = pneg %p43
        %p251 = pneg %p40
        %p252 = pneg %p64
        %p253 = pneg %p61
        %p254 = pneg %p85
        %p255 = pneg %p82
        %p256 = pneg %p106
        %p257 = pneg %p103
        %p258 = pneg %p127
        %p259 = pneg %p124
        %p260 = pneg %p148
        %p261 = pneg %p145
        %p262 = pneg %p169
        %p263 = pneg %p166
        %p264 = pneg %p195
        %p265 = pneg %p192
        %s266 = sand.u32 %s182, 1
        %s267 = scalar_lea.sflag [#allocation4], %s266
        %s268 = sand.u32 %s182, 1
        %s269 = scalar_lea.vmem [#allocation3], %s268
        %p270 = scmp.lt.s32.totalorder %s22, 1
        %s271 = scalar_select %p270, %s22, 1
        %s272 = smul.addr %s271, 8
        %s273 = scalar_lea.vmem %s0, %s272
        %v275 = vld [vmem:[%s273] sm:$0x3f]
        %v276 = vld [vmem:[%s1] sm:$0xff]
        %v277 = vld [vmem:[%s1 + $0x8] sm:$0xff]
        %v278 = vld [vmem:[%s1 + $0x10] sm:$0xff]
        %v279 = vld [vmem:[%s1 + $0x18] sm:$0xff]
        %v280 = vld [vmem:[%s1 + $0x20] sm:$0xff]
        %v281 = vld [vmem:[%s1 + $0x28] sm:$0xff]
        %v282 = vld [vmem:[%s1 + $0x30] sm:$0xff]
        %v283 = vld [vmem:[%s1 + $0x38] sm:$0xff]
        %285 = vset.pattern.permute.xlu0 0
        %286 = vperm.xlu0 %285, %v276
        %v287 = vpop.permute.xlu0 %286
        %290 = vset.pattern.permute.xlu0 0
        %291 = vperm.xlu0 %290, %v277
        %v292 = vpop.permute.xlu0 %291
        %295 = vset.pattern.permute.xlu0 0
        %296 = vperm.xlu0 %295, %v278
        %v297 = vpop.permute.xlu0 %296
        %300 = vset.pattern.permute.xlu0 0
        %301 = vperm.xlu0 %300, %v279
        %v302 = vpop.permute.xlu0 %301
        %305 = vset.pattern.permute.xlu0 0
        %306 = vperm.xlu0 %305, %v280
        %v307 = vpop.permute.xlu0 %306
        %310 = vset.pattern.permute.xlu0 0
        %311 = vperm.xlu0 %310, %v281
        %v312 = vpop.permute.xlu0 %311
        %315 = vset.pattern.permute.xlu0 0
        %316 = vperm.xlu0 %315, %v282
        %v317 = vpop.permute.xlu0 %316
        %320 = vset.pattern.permute.xlu0 0
        %321 = vperm.xlu0 %320, %v283
        %v322 = vpop.permute.xlu0 %321
        %v324 = vlaneseq
        %v325 = vshrl.u32 %v324, 7
        %v326 = vsub.s32 0, %v325
        %v327 = vrot.slane %v275, %v326
        %v328 = vmul.f32 %v287, %v327
        %v329 = vmul.f32 %v292, %v327
        %v330 = vmul.f32 %v297, %v327
        %v331 = vmul.f32 %v302, %v327
        %v332 = vmul.f32 %v307, %v327
        %v333 = vmul.f32 %v312, %v327
        %v334 = vmul.f32 %v317, %v327
        %v335 = vmul.f32 %v322, %v327
        %336 = vset.pattern.permute.xlu0 1
        %337 = vperm.xlu0 %336, %v276
        %v338 = vpop.permute.xlu0 %337
        %340 = vset.pattern.permute.xlu0 1
        %341 = vperm.xlu0 %340, %v277
        %v342 = vpop.permute.xlu0 %341
        %344 = vset.pattern.permute.xlu0 1
        %345 = vperm.xlu0 %344, %v278
        %v346 = vpop.permute.xlu0 %345
        %348 = vset.pattern.permute.xlu0 1
        %349 = vperm.xlu0 %348, %v279
        %v350 = vpop.permute.xlu0 %349
        %352 = vset.pattern.permute.xlu0 1
        %353 = vperm.xlu0 %352, %v280
        %v354 = vpop.permute.xlu0 %353
        %356 = vset.pattern.permute.xlu0 1
        %357 = vperm.xlu0 %356, %v281
        %v358 = vpop.permute.xlu0 %357
        %360 = vset.pattern.permute.xlu0 1
        %361 = vperm.xlu0 %360, %v282
        %v362 = vpop.permute.xlu0 %361
        %364 = vset.pattern.permute.xlu0 1
        %365 = vperm.xlu0 %364, %v283
        %v366 = vpop.permute.xlu0 %365
        %v368 = vlaneseq
        %v369 = vshrl.u32 %v368, 7
        %v370 = vsub.s32 1, %v369
        %v371 = vrot.slane %v275, %v370
        %v372 = vmul.f32 %v338, %v371
        %v373 = vmul.f32 %v342, %v371
        %v374 = vmul.f32 %v346, %v371
        %v375 = vmul.f32 %v350, %v371
        %v376 = vmul.f32 %v354, %v371
        %v377 = vmul.f32 %v358, %v371
        %v378 = vmul.f32 %v362, %v371
        %v379 = vmul.f32 %v366, %v371
        %v380 = vadd.f32 %v328, %v372
        %v381 = vadd.f32 %v329, %v373
        %v382 = vadd.f32 %v330, %v374
        %v383 = vadd.f32 %v331, %v375
        %v384 = vadd.f32 %v332, %v376
        %v385 = vadd.f32 %v333, %v377
        %v386 = vadd.f32 %v334, %v378
        %v387 = vadd.f32 %v335, %v379
        %388 = vset.pattern.permute.xlu0 2
        %389 = vperm.xlu0 %388, %v276
        %v390 = vpop.permute.xlu0 %389
        %392 = vset.pattern.permute.xlu0 2
        %393 = vperm.xlu0 %392, %v277
        %v394 = vpop.permute.xlu0 %393
        %396 = vset.pattern.permute.xlu0 2
        %397 = vperm.xlu0 %396, %v278
        %v398 = vpop.permute.xlu0 %397
        %400 = vset.pattern.permute.xlu0 2
        %401 = vperm.xlu0 %400, %v279
        %v402 = vpop.permute.xlu0 %401
        %404 = vset.pattern.permute.xlu0 2
        %405 = vperm.xlu0 %404, %v280
        %v406 = vpop.permute.xlu0 %405
        %408 = vset.pattern.permute.xlu0 2
        %409 = vperm.xlu0 %408, %v281
        %v410 = vpop.permute.xlu0 %409
        %412 = vset.pattern.permute.xlu0 2
        %413 = vperm.xlu0 %412, %v282
        %v414 = vpop.permute.xlu0 %413
        %416 = vset.pattern.permute.xlu0 2
        %417 = vperm.xlu0 %416, %v283
        %v418 = vpop.permute.xlu0 %417
        %v420 = vlaneseq
        %v421 = vshrl.u32 %v420, 7
        %v422 = vsub.s32 2, %v421
        %v423 = vrot.slane %v275, %v422
        %v424 = vmul.f32 %v390, %v423
        %v425 = vmul.f32 %v394, %v423
        %v426 = vmul.f32 %v398, %v423
        %v427 = vmul.f32 %v402, %v423
        %v428 = vmul.f32 %v406, %v423
        %v429 = vmul.f32 %v410, %v423
        %v430 = vmul.f32 %v414, %v423
        %v431 = vmul.f32 %v418, %v423
        %v432 = vadd.f32 %v380, %v424
        %v433 = vadd.f32 %v381, %v425
        %v434 = vadd.f32 %v382, %v426
        %v435 = vadd.f32 %v383, %v427
        %v436 = vadd.f32 %v384, %v428
        %v437 = vadd.f32 %v385, %v429
        %v438 = vadd.f32 %v386, %v430
        %v439 = vadd.f32 %v387, %v431
        %440 = vset.pattern.permute.xlu0 3
        %441 = vperm.xlu0 %440, %v276
        %v442 = vpop.permute.xlu0 %441
        %444 = vset.pattern.permute.xlu0 3
        %445 = vperm.xlu0 %444, %v277
        %v446 = vpop.permute.xlu0 %445
        %448 = vset.pattern.permute.xlu0 3
        %449 = vperm.xlu0 %448, %v278
        %v450 = vpop.permute.xlu0 %449
        %452 = vset.pattern.permute.xlu0 3
        %453 = vperm.xlu0 %452, %v279
        %v454 = vpop.permute.xlu0 %453
        %456 = vset.pattern.permute.xlu0 3
        %457 = vperm.xlu0 %456, %v280
        %v458 = vpop.permute.xlu0 %457
        %460 = vset.pattern.permute.xlu0 3
        %461 = vperm.xlu0 %460, %v281
        %v462 = vpop.permute.xlu0 %461
        %464 = vset.pattern.permute.xlu0 3
        %465 = vperm.xlu0 %464, %v282
        %v466 = vpop.permute.xlu0 %465
        %468 = vset.pattern.permute.xlu0 3
        %469 = vperm.xlu0 %468, %v283
        %v470 = vpop.permute.xlu0 %469
        %v472 = vlaneseq
        %v473 = vshrl.u32 %v472, 7
        %v474 = vsub.s32 3, %v473
        %v475 = vrot.slane %v275, %v474
        %v476 = vmul.f32 %v442, %v475
        %v477 = vmul.f32 %v446, %v475
        %v478 = vmul.f32 %v450, %v475
        %v479 = vmul.f32 %v454, %v475
        %v480 = vmul.f32 %v458, %v475
        %v481 = vmul.f32 %v462, %v475
        %v482 = vmul.f32 %v466, %v475
        %v483 = vmul.f32 %v470, %v475
        %v484 = vadd.f32 %v432, %v476
        %v485 = vadd.f32 %v433, %v477
        %v486 = vadd.f32 %v434, %v478
        %v487 = vadd.f32 %v435, %v479
        %v488 = vadd.f32 %v436, %v480
        %v489 = vadd.f32 %v437, %v481
        %v490 = vadd.f32 %v438, %v482
        %v491 = vadd.f32 %v439, %v483
        %492 = vset.pattern.permute.xlu0 4
        %493 = vperm.xlu0 %492, %v276
        %v494 = vpop.permute.xlu0 %493
        %496 = vset.pattern.permute.xlu0 4
        %497 = vperm.xlu0 %496, %v277
        %v498 = vpop.permute.xlu0 %497
        %500 = vset.pattern.permute.xlu0 4
        %501 = vperm.xlu0 %500, %v278
        %v502 = vpop.permute.xlu0 %501
        %504 = vset.pattern.permute.xlu0 4
        %505 = vperm.xlu0 %504, %v279
        %v506 = vpop.permute.xlu0 %505
        %508 = vset.pattern.permute.xlu0 4
        %509 = vperm.xlu0 %508, %v280
        %v510 = vpop.permute.xlu0 %509
        %512 = vset.pattern.permute.xlu0 4
        %513 = vperm.xlu0 %512, %v281
        %v514 = vpop.permute.xlu0 %513
        %516 = vset.pattern.permute.xlu0 4
        %517 = vperm.xlu0 %516, %v282
        %v518 = vpop.permute.xlu0 %517
        %520 = vset.pattern.permute.xlu0 4
        %521 = vperm.xlu0 %520, %v283
        %v522 = vpop.permute.xlu0 %521
        %v524 = vlaneseq
        %v525 = vshrl.u32 %v524, 7
        %v526 = vsub.s32 4, %v525
        %v527 = vrot.slane %v275, %v526
        %v528 = vmul.f32 %v494, %v527
        %v529 = vmul.f32 %v498, %v527
        %v530 = vmul.f32 %v502, %v527
        %v531 = vmul.f32 %v506, %v527
        %v532 = vmul.f32 %v510, %v527
        %v533 = vmul.f32 %v514, %v527
        %v534 = vmul.f32 %v518, %v527
        %v535 = vmul.f32 %v522, %v527
        %v536 = vadd.f32 %v484, %v528
        %v537 = vadd.f32 %v485, %v529
        %v538 = vadd.f32 %v486, %v530
        %v539 = vadd.f32 %v487, %v531
        %v540 = vadd.f32 %v488, %v532
        %v541 = vadd.f32 %v489, %v533
        %v542 = vadd.f32 %v490, %v534
        %v543 = vadd.f32 %v491, %v535
        %544 = vset.pattern.permute.xlu0 5
        %545 = vperm.xlu0 %544, %v276
        %v546 = vpop.permute.xlu0 %545
        %548 = vset.pattern.permute.xlu0 5
        %549 = vperm.xlu0 %548, %v277
        %v550 = vpop.permute.xlu0 %549
        %552 = vset.pattern.permute.xlu0 5
        %553 = vperm.xlu0 %552, %v278
        %v554 = vpop.permute.xlu0 %553
        %556 = vset.pattern.permute.xlu0 5
        %557 = vperm.xlu0 %556, %v279
        %v558 = vpop.permute.xlu0 %557
        %560 = vset.pattern.permute.xlu0 5
        %561 = vperm.xlu0 %560, %v280
        %v562 = vpop.permute.xlu0 %561
        %564 = vset.pattern.permute.xlu0 5
        %565 = vperm.xlu0 %564, %v281
        %v566 = vpop.permute.xlu0 %565
        %568 = vset.pattern.permute.xlu0 5
        %569 = vperm.xlu0 %568, %v282
        %v570 = vpop.permute.xlu0 %569
        %572 = vset.pattern.permute.xlu0 5
        %573 = vperm.xlu0 %572, %v283
        %v574 = vpop.permute.xlu0 %573
        %v576 = vlaneseq
        %v577 = vshrl.u32 %v576, 7
        %v578 = vsub.s32 5, %v577
        %v579 = vrot.slane %v275, %v578
        %v580 = vmul.f32 %v546, %v579
        %v581 = vmul.f32 %v550, %v579
        %v582 = vmul.f32 %v554, %v579
        %v583 = vmul.f32 %v558, %v579
        %v584 = vmul.f32 %v562, %v579
        %v585 = vmul.f32 %v566, %v579
        %v586 = vmul.f32 %v570, %v579
        %v587 = vmul.f32 %v574, %v579
        %v588 = vadd.f32 %v536, %v580
        %v589 = vadd.f32 %v537, %v581
        %v590 = vadd.f32 %v538, %v582
        %v591 = vadd.f32 %v539, %v583
        %v592 = vadd.f32 %v540, %v584
        %v593 = vadd.f32 %v541, %v585
        %v594 = vadd.f32 %v542, %v586
        %v595 = vadd.f32 %v543, %v587
        %v596 = vld [vmem:[%s2] sm:$0xff]
        %v597 = vld [vmem:[%s2 + $0x8] sm:$0xff]
        %v598 = vld [vmem:[%s2 + $0x10] sm:$0xff]
        %v599 = vld [vmem:[%s2 + $0x18] sm:$0xff]
        %v600 = vld [vmem:[%s2 + $0x20] sm:$0xff]
        %v601 = vld [vmem:[%s2 + $0x28] sm:$0xff]
        %v602 = vld [vmem:[%s2 + $0x30] sm:$0xff]
        %v603 = vld [vmem:[%s2 + $0x38] sm:$0xff]
        %605 = vset.pattern.permute.xlu0 0
        %606 = vperm.xlu0 %605, %v596
        %v607 = vpop.permute.xlu0 %606
        %610 = vset.pattern.permute.xlu0 0
        %611 = vperm.xlu0 %610, %v597
        %v612 = vpop.permute.xlu0 %611
        %615 = vset.pattern.permute.xlu0 0
        %616 = vperm.xlu0 %615, %v598
        %v617 = vpop.permute.xlu0 %616
        %620 = vset.pattern.permute.xlu0 0
        %621 = vperm.xlu0 %620, %v599
        %v622 = vpop.permute.xlu0 %621
        %625 = vset.pattern.permute.xlu0 0
        %626 = vperm.xlu0 %625, %v600
        %v627 = vpop.permute.xlu0 %626
        %630 = vset.pattern.permute.xlu0 0
        %631 = vperm.xlu0 %630, %v601
        %v632 = vpop.permute.xlu0 %631
        %635 = vset.pattern.permute.xlu0 0
        %636 = vperm.xlu0 %635, %v602
        %v637 = vpop.permute.xlu0 %636
        %640 = vset.pattern.permute.xlu0 0
        %641 = vperm.xlu0 %640, %v603
        %v642 = vpop.permute.xlu0 %641
        %v644 = vadd.f32 %v588, %v607
        %v645 = vadd.f32 %v589, %v612
        %v646 = vadd.f32 %v590, %v617
        %v647 = vadd.f32 %v591, %v622
        %v648 = vadd.f32 %v592, %v627
        %v649 = vadd.f32 %v593, %v632
        %v650 = vadd.f32 %v594, %v637
        %v651 = vadd.f32 %v595, %v642
        %v652 = vmax.f32 %v644, 0.0
        %v653 = vmax.f32 %v645, 0.0
        %v654 = vmax.f32 %v646, 0.0
        %v655 = vmax.f32 %v647, 0.0
        %v656 = vmax.f32 %v648, 0.0
        %v657 = vmax.f32 %v649, 0.0
        %v658 = vmax.f32 %v650, 0.0
        %v659 = vmax.f32 %v651, 0.0
        %v660 = vld [vmem:[%s3] sm:$0xff]
        %v661 = vld [vmem:[%s3 + $0x8] sm:$0xff]
        %v662 = vld [vmem:[%s3 + $0x10] sm:$0xff]
        %v663 = vld [vmem:[%s3 + $0x18] sm:$0xff]
        %v664 = vld [vmem:[%s3 + $0x20] sm:$0xff]
        %v665 = vld [vmem:[%s3 + $0x28] sm:$0xff]
        %v666 = vld [vmem:[%s3 + $0x30] sm:$0xff]
        %v667 = vld [vmem:[%s3 + $0x38] sm:$0xff]
        %v668 = vpack.c.bf16 %v661, %v660
        %v669 = vpack.c.bf16 %v663, %v662
        %v670 = vpack.c.bf16 %v665, %v664
        %v671 = vpack.c.bf16 %v667, %v666
        %v672 = vpack.c.bf16 %v653, %v652
        %v673 = vpack.c.bf16 %v655, %v654
        %v674 = vpack.c.bf16 %v657, %v656
        %v675 = vpack.c.bf16 %v659, %v658
        %v676 = vld [vmem:[%s4] sm:$0xff]
        %v677 = vld [vmem:[%s4 + $0x8] sm:$0xff]
        %v678 = vld [vmem:[%s4 + $0x10] sm:$0xff]
        %v679 = vld [vmem:[%s4 + $0x18] sm:$0xff]
        %v680 = vld [vmem:[%s4 + $0x20] sm:$0xff]
        %v681 = vld [vmem:[%s4 + $0x28] sm:$0xff]
        %v682 = vld [vmem:[%s4 + $0x30] sm:$0xff]
        %v683 = vld [vmem:[%s4 + $0x38] sm:$0xff]
        %685 = vset.pattern.permute.xlu0 0
        %686 = vperm.xlu0 %685, %v676
        %v687 = vpop.permute.xlu0 %686
        %690 = vset.pattern.permute.xlu0 0
        %691 = vperm.xlu0 %690, %v677
        %v692 = vpop.permute.xlu0 %691
        %695 = vset.pattern.permute.xlu0 0
        %696 = vperm.xlu0 %695, %v678
        %v697 = vpop.permute.xlu0 %696
        %700 = vset.pattern.permute.xlu0 0
        %701 = vperm.xlu0 %700, %v679
        %v702 = vpop.permute.xlu0 %701
        %705 = vset.pattern.permute.xlu0 0
        %706 = vperm.xlu0 %705, %v680
        %v707 = vpop.permute.xlu0 %706
        %710 = vset.pattern.permute.xlu0 0
        %711 = vperm.xlu0 %710, %v681
        %v712 = vpop.permute.xlu0 %711
        %715 = vset.pattern.permute.xlu0 0
        %716 = vperm.xlu0 %715, %v682
        %v717 = vpop.permute.xlu0 %716
        %720 = vset.pattern.permute.xlu0 0
        %721 = vperm.xlu0 %720, %v683
        %v722 = vpop.permute.xlu0 %721
        %vm724 = vcmask 523264
        %v726 = vsel %vm724, %v668, 0
        %v729 = vsel %vm724, %v669, 0
        %v732 = vsel %vm724, %v670, 0
        %v735 = vsel %vm724, %v671, 0
        %737 = vmatprep.subr.bf16.mxu0 0
        %738 = vmatpush1.bf16.msra.mxu0 %v672
        %739 = vmatprep.subr.bf16.mxu0 0
        %740 = vmatpush1.bf16.msra.mxu0 %v673
        %741 = vmatprep.subr.bf16.mxu0 0
        %742 = vmatpush1.bf16.msra.mxu0 %v674
        %743 = vmatprep.subr.bf16.mxu0 0
        %744 = vmatpush1.bf16.msra.mxu0 %v675
        %745 = vmatprep.subr.bf16.mxu0 0
        %746 = vmatpush1.bf16.msra.mxu0 0
        %747 = vmatprep.subr.bf16.mxu0 0
        %748 = vmatpush1.bf16.msra.mxu0 0
        %749 = vmatprep.subr.bf16.mxu0 0
        %750 = vmatpush1.bf16.msra.mxu0 0
        %751 = vmatprep.subr.bf16.mxu0 0
        %752 = vmatpush1.bf16.msra.mxu0 0
        %753 = vmatprep.subr.bf16.mxu0 0
        %754 = vmatpush1.bf16.msra.mxu0 0
        %755 = vmatprep.subr.bf16.mxu0 0
        %756 = vmatpush1.bf16.msra.mxu0 0
        %757 = vmatprep.subr.bf16.mxu0 0
        %758 = vmatpush1.bf16.msra.mxu0 0
        %759 = vmatprep.subr.bf16.mxu0 0
        %760 = vmatpush1.bf16.msra.mxu0 0
        %761 = vmatprep.subr.bf16.mxu0 0
        %762 = vmatpush1.bf16.msra.mxu0 0
        %763 = vmatprep.subr.bf16.mxu0 0
        %764 = vmatpush1.bf16.msra.mxu0 0
        %765 = vmatprep.subr.bf16.mxu0 0
        %766 = vmatpush1.bf16.msra.mxu0 0
        %767 = vmatprep.subr.bf16.mxu0 0
        %768 = vmatpush1.bf16.msra.mxu0 0
        %769 = vmatprep.mubr.bf16.mxu0 0
        %770 = vmatmul.mubr.bf16.gmra.mrb[0].mxu0 %v726
        %v771 = vpop.f32.mrb[0].mxu0
        %v772 = vadd.f32 %v687, %v771
        %v773 = vpop.f32.mrb[0].mxu0
        %v774 = vpop.f32.mrb[0].mxu0
        %v775 = vadd.f32 %v692, %v774
        %v776 = vpop.f32.mrb[0].mxu0
        %777 = vmatprep.mubr.bf16.mxu0 0
        %778 = vmatmul.mubr.bf16.gmra.mrb[0].mxu0 %v729
        %v779 = vpop.f32.mrb[0].mxu0
        %v780 = vadd.f32 %v697, %v779
        %v781 = vpop.f32.mrb[0].mxu0
        %v782 = vpop.f32.mrb[0].mxu0
        %v783 = vadd.f32 %v702, %v782
        %v784 = vpop.f32.mrb[0].mxu0
        %785 = vmatprep.mubr.bf16.mxu0 0
        %786 = vmatmul.mubr.bf16.gmra.mrb[0].mxu0 %v732
        %v787 = vpop.f32.mrb[0].mxu0
        %v788 = vadd.f32 %v707, %v787
        %v789 = vpop.f32.mrb[0].mxu0
        %v790 = vpop.f32.mrb[0].mxu0
        %v791 = vadd.f32 %v712, %v790
        %v792 = vpop.f32.mrb[0].mxu0
        %793 = vmatprep.mubr.bf16.mxu0 0
        %794 = vmatmul.mubr.bf16.gmra.mrb[0].mxu0 %v735
        %v795 = vpop.f32.mrb[0].mxu0
        %v796 = vadd.f32 %v717, %v795
        %v797 = vpop.f32.mrb[0].mxu0
        %v798 = vpop.f32.mrb[0].mxu0
        %v799 = vadd.f32 %v722, %v798
        %v800 = vpop.f32.mrb[0].mxu0
        %801 = vdwg.mxu0
        %v802 = vmax.f32 %v772, 0.0
        %v803 = vmax.f32 %v775, 0.0
        %v804 = vmax.f32 %v780, 0.0
        %v805 = vmax.f32 %v783, 0.0
        %v806 = vmax.f32 %v788, 0.0
        %v807 = vmax.f32 %v791, 0.0
        %v808 = vmax.f32 %v796, 0.0
        %v809 = vmax.f32 %v799, 0.0
        %v810 = vld [vmem:[%s5] sm:$0x1]
        %v811 = vpack.c.bf16 %v810, %v810
        %v812 = vpack.c.bf16 %v803, %v802
        %v813 = vpack.c.bf16 %v805, %v804
        %v814 = vpack.c.bf16 %v807, %v806
        %v815 = vpack.c.bf16 %v809, %v808
        %s816 = sld [smem:[#allocation2]]
        %v817 = vstv %s816
        %v819 = vsel %vm724, %v811, 0
        %821 = vmatprep.subr.bf16.mxu0 0
        %822 = vmatpush1.bf16.msra.mxu0 %v812
        %823 = vmatprep.subr.bf16.mxu0 0
        %824 = vmatpush1.bf16.msra.mxu0 %v813
        %825 = vmatprep.subr.bf16.mxu0 0
        %826 = vmatpush1.bf16.msra.mxu0 %v814
        %827 = vmatprep.subr.bf16.mxu0 0
        %828 = vmatpush1.bf16.msra.mxu0 %v815
        %829 = vmatprep.subr.bf16.mxu0 0
        %830 = vmatpush1.bf16.msra.mxu0 0
        %831 = vmatprep.subr.bf16.mxu0 0
        %832 = vmatpush1.bf16.msra.mxu0 0
        %833 = vmatprep.subr.bf16.mxu0 0
        %834 = vmatpush1.bf16.msra.mxu0 0
        %835 = vmatprep.subr.bf16.mxu0 0
        %836 = vmatpush1.bf16.msra.mxu0 0
        %837 = vmatprep.subr.bf16.mxu0 0
        %838 = vmatpush1.bf16.msra.mxu0 0
        %839 = vmatprep.subr.bf16.mxu0 0
        %840 = vmatpush1.bf16.msra.mxu0 0
        %841 = vmatprep.subr.bf16.mxu0 0
        %842 = vmatpush1.bf16.msra.mxu0 0
        %843 = vmatprep.subr.bf16.mxu0 0
        %844 = vmatpush1.bf16.msra.mxu0 0
        %845 = vmatprep.subr.bf16.mxu0 0
        %846 = vmatpush1.bf16.msra.mxu0 0
        %847 = vmatprep.subr.bf16.mxu0 0
        %848 = vmatpush1.bf16.msra.mxu0 0
        %849 = vmatprep.subr.bf16.mxu0 0
        %850 = vmatpush1.bf16.msra.mxu0 0
        %851 = vmatprep.subr.bf16.mxu0 0
        %852 = vmatpush1.bf16.msra.mxu0 0
        %853 = vmatprep.mubr.bf16.mxu0 0
        %854 = vmatmul.mubr.bf16.gmra.mrb[0].mxu0 %v819
        %v855 = vpop.f32.mrb[0].mxu0
        %v856 = vadd.f32 %v817, %v855
        %v857 = vpop.f32.mrb[0].mxu0
        %v858 = vpop.f32.mrb[0].mxu0
        %v859 = vpop.f32.mrb[0].mxu0
        %860 = vdwg.mxu0
        %861 = vst [vmem:[%s269] sm:$0x1] %v856
        %s862 = sand.u32 %s182, 1
        %s863 = scalar_lea.sflag [#allocation4], %s862
        %s864 = sand.u32 %s182, 1
        %s865 = scalar_lea.vmem [#allocation3], %s864
        // Predicated region
        $region49: #{tpu_custom_call.1} parent=47 // pred_check
          %p866 = pneg %p192
        $region50: #{tpu_custom_call.1} parent=47 // pred_check_branch
          %868 = sbr.rel (%p866) target = $region52
        $region51: #{tpu_custom_call.1} parent=47 // pred_region
          %s870 = ssub.s32 16, 16
          %871 = vsyncadd %s863, %s870
          %s872 = smul.addr %s22, 16
          %s873 = scalar_lea.hbm %s7, %s872
          %s875 = sshll.u32 %s865, 4
          %s876 = int_to_ptr.vmem [resolvable:$true] %s875
          %878 = dma.vmem_to_hbm [thread:$0]  %s876, 16, %s873, %s863
        $region52: #{tpu_custom_call.1} parent=47 // pred_fallthru
          _
      $region48: #{tpu_custom_call.1} parent=5 // pred_fallthru
        _
      %p879 = scmp.le.s32.totalorder 2, %s17
      // Predicated region
      $region53: #{tpu_custom_call.1} parent=5 // pred_check
        %p880 = pneg %p879
      $region54: #{tpu_custom_call.1} parent=5 // pred_check_branch
        %882 = sbr.rel (%p880) target = $region56
      $region55: #{tpu_custom_call.1} parent=5 // pred_region
        %s883 = ssub.s32 %s17, 2
        // Predicated region
        $region57: #{tpu_custom_call.1} parent=55 // pred_check
          %p884 = pneg %p198
        $region58: #{tpu_custom_call.1} parent=55 // pred_check_branch
          %886 = sbr.rel (%p884) target = $region60
        $region59: #{tpu_custom_call.1} parent=55 // pred_region
          %s887 = sand.u32 %s183, 1
          %s888 = scalar_lea.sflag [#allocation4], %s887
          %s889 = sand.u32 %s183, 1
          %s890 = scalar_lea.vmem [#allocation3], %s889
          %891 = dma.done %s888, 16
        $region60: #{tpu_custom_call.1} parent=55 // pred_fallthru
          _
      $region56: #{tpu_custom_call.1} parent=5 // pred_fallthru
        _
    $region6: #{tpu_custom_call.1} parent=1 // loop_footer
      %s21 = sadd.s32 1, %s17
    $region7: #{tpu_custom_call.1} parent=1 // loop_footer_branch
      %16 = sbr.rel target = $region3
    $region8: #{tpu_custom_call.1} parent=1 // loop_exit
      _
    %892 = vsyncpa [#allocation4], 1
    %s893 = scalar_lea.sflag [#allocation4], 1
    %894 = vsyncpa %s893, 1

</llo_original>
